<compile_context>
chip_gen: v5e
topology: v5e:2x2
jax: 0.10.0
libtpu: 0.0.40
codegen_flags: <defaults>
</compile_context>

<pallas_src>
import jax
import jax.numpy as jnp
from jax import lax
from jax.experimental import pallas as pl
from jax.experimental.pallas import tpu as pltpu


def rnn_many_to_one_kernel(x_ref, wxh_ref, whh_ref, wl_ref, brh_ref, bl_ref,
                           out_ref, xw_ref):
    """Whole forward pass in one invocation.

    x_ref   : (B, S, I)  full input
    wxh_ref : (I, H)     wxh.weight^T
    whh_ref : (H, H)     whh.weight^T
    wl_ref  : (H, I)     linear.weight^T
    brh_ref : (1, H)     bxh + bhh  (combined recurrent bias)
    bl_ref  : (1, I)     linear bias
    out_ref : (S, I)     output of the LAST step only
    xw_ref  : (B, S, H)  VMEM scratch: precomputed x @ Wxh^T + (bxh + bhh)
    """
    B, S, I = x_ref.shape
    H = whh_ref.shape[0]

    # Hoisted out of the recurrence: input-to-hidden projection for all B
    # steps in a single matmul, combined bias added once.
    x_flat = x_ref[...].reshape(B * S, I)
    xw = jnp.dot(x_flat, wxh_ref[...], preferred_element_type=jnp.float32)
    xw_ref[...] = (xw + brh_ref[...]).reshape(B, S, H)

    whh = whh_ref[...]  # hoisted weight load (read once, reused every step)

    def step(b, h):
        # h_{b+1} = tanh(x_b @ Wxh^T + bxh + h_b @ Whh^T + bhh)
        pre = xw_ref[b] + jnp.dot(h, whh, preferred_element_type=jnp.float32)
        return jnp.tanh(pre)

    h_final = lax.fori_loop(0, B, step, jnp.zeros((S, H), jnp.float32),
                            unroll=True)

    # Output projection computed exactly once (last-write-wins semantics).
    out = jnp.dot(h_final, wl_ref[...], preferred_element_type=jnp.float32)
    out_ref[...] = (out + bl_ref[...]).astype(out_ref.dtype)


def rnn_many_to_one(x, wxh_t, bxh, whh_t, bhh, wl_t, bl):
    B, S, I = x.shape
    H = wxh_t.shape[1]
    assert B == S, "module semantics require batch_size == seq_len"

    # Fold the two recurrent biases host-side (wrapper-level, one-time cost).
    b_comb = (bxh + bhh).astype(jnp.float32)

    vmem = pl.BlockSpec(memory_space=pltpu.MemorySpace.VMEM)
    return pl.pallas_call(
        rnn_many_to_one_kernel,
        out_shape=jax.ShapeDtypeStruct((S, I), jnp.float32),
        in_specs=[vmem, vmem, vmem, vmem, vmem, vmem],
        out_specs=vmem,
        scratch_shapes=[pltpu.VMEM((B, S, H), jnp.float32)],
    )(x, wxh_t, whh_t, wl_t, b_comb, bl)


def reference_forward(x, wxh_t, bxh, whh_t, bhh, wl_t, bl):
    """Pure-JAX replica of the PyTorch forward (sanity check)."""
    B, S, I = x.shape
    H = wxh_t.shape[1]
    h = jnp.zeros((B, H), jnp.float32)   # B == S, so shapes line up as in torch
    out = None
    for b in range(B):
        inp = x[b]                                    # (S, I)
        hidden = jnp.tanh(inp @ wxh_t + bxh + h @ whh_t + bhh)
        out = hidden @ wl_t + bl
        h = hidden
    return out


if __name__ == "__main__":
    # Shapes consistent with the module: batch == seq (required by its own
    # broadcasting), small sizes.
    B = S = 8
    INPUT = 16
    HIDDEN = 32

    key = jax.random.PRNGKey(0)
    kx, k1, k2, k3, k4, k5, k6 = jax.random.split(key, 7)

    x = jax.random.normal(kx, (B, S, INPUT), jnp.float32)

    # Deterministic parameter init (Linear: weight (out, in), bias (out,));
    # stored transposed so the kernel computes y = x @ W^T + b on the MXU.
    scale = 0.1
    wxh_t = scale * jax.random.normal(k1, (INPUT, HIDDEN), jnp.float32)
    bxh = scale * jax.random.normal(k2, (1, HIDDEN), jnp.float32)
    whh_t = scale * jax.random.normal(k3, (HIDDEN, HIDDEN), jnp.float32)
    bhh = scale * jax.random.normal(k4, (1, HIDDEN), jnp.float32)
    wl_t = scale * jax.random.normal(k5, (HIDDEN, INPUT), jnp.float32)
    bl = scale * jax.random.normal(k6, (1, INPUT), jnp.float32)

    out = rnn_many_to_one(x, wxh_t, bxh, whh_t, bhh, wl_t, bl)
    out = jax.block_until_ready(out)

    ref = reference_forward(x, wxh_t, bxh, whh_t, bhh, wl_t, bl)
    assert out.shape == (S, INPUT)
    assert jnp.allclose(out, ref, atol=1e-5, rtol=1e-5), (
        f"max abs err {jnp.max(jnp.abs(out - ref))}")

    print("KERNEL_OK")
</pallas_src>

<mosaic_0001>
module attributes {stable_mosaic.version = 11 : i64} {
  func.func @rnn_many_to_one_kernel(%arg0: memref<8x8x16xf32, #tpu.memory_space<vmem>>, %arg1: memref<16x32xf32, #tpu.memory_space<vmem>>, %arg2: memref<32x32xf32, #tpu.memory_space<vmem>>, %arg3: memref<32x16xf32, #tpu.memory_space<vmem>>, %arg4: memref<1x32xf32, #tpu.memory_space<vmem>>, %arg5: memref<1x16xf32, #tpu.memory_space<vmem>>, %arg6: memref<8x16xf32, #tpu.memory_space<vmem>>, %arg7: memref<8x8x32xf32, #tpu.memory_space<vmem>>) attributes {dimension_semantics = [], scalar_prefetch = 0 : i64, scratch_operands = 1 : i64, tpu.core_type = #tpu.core_type<tc>} {
    %c0 = arith.constant 0 : index
    %c0_0 = arith.constant 0 : index
    %c0_1 = arith.constant 0 : index
    %0 = vector.load %arg0[%c0, %c0_0, %c0_1] : memref<8x8x16xf32, #tpu.memory_space<vmem>>, vector<8x8x16xf32>
    %1 = vector.shape_cast %0 : vector<8x8x16xf32> to vector<64x16xf32>
    %c0_2 = arith.constant 0 : index
    %c0_3 = arith.constant 0 : index
    %2 = vector.load %arg1[%c0_2, %c0_3] : memref<16x32xf32, #tpu.memory_space<vmem>>, vector<16x32xf32>
    %cst = arith.constant dense<0.000000e+00> : vector<64x32xf32>
    %3 = tpu.matmul %1, %2, %cst {dimension_numbers = #tpu.dot_dimension_numbers<[1], [0], [0], [1], [0, 0, 1, 1], [], []>} : vector<64x16xf32>, vector<16x32xf32>, vector<64x32xf32> -> vector<64x32xf32>
    %c0_4 = arith.constant 0 : index
    %c0_5 = arith.constant 0 : index
    %4 = vector.load %arg4[%c0_4, %c0_5] : memref<1x32xf32, #tpu.memory_space<vmem>>, vector<1x32xf32>
    %5 = vector.broadcast %4 : vector<1x32xf32> to vector<64x32xf32>
    %6 = arith.addf %3, %5 : vector<64x32xf32>
    %7 = vector.shape_cast %6 : vector<64x32xf32> to vector<8x8x32xf32>
    %c0_6 = arith.constant 0 : index
    %c0_7 = arith.constant 0 : index
    %c0_8 = arith.constant 0 : index
    %8 = vector.load %arg7[%c0_6, %c0_7, %c0_8] : memref<8x8x32xf32, #tpu.memory_space<vmem>>, vector<8x8x32xf32>
    tpu.vector_store %arg7[%c0_6, %c0_7, %c0_8], %7 {strides = array<i32>} : memref<8x8x32xf32, #tpu.memory_space<vmem>>, vector<8x8x32xf32>,
    %c0_9 = arith.constant 0 : index
    %c0_10 = arith.constant 0 : index
    %9 = vector.load %arg2[%c0_9, %c0_10] : memref<32x32xf32, #tpu.memory_space<vmem>>, vector<32x32xf32>
    %cst_11 = arith.constant 0.000000e+00 : f32
    %10 = vector.broadcast %cst_11 : f32 to vector<8x32xf32>
    %c0_i32 = arith.constant 0 : i32
    %11 = arith.index_cast %c0_i32 : i32 to index
    %c0_12 = arith.constant 0 : index
    %c0_13 = arith.constant 0 : index
    %12 = vector.load %arg7[%11, %c0_12, %c0_13] : memref<8x8x32xf32, #tpu.memory_space<vmem>>, vector<1x8x32xf32>
    %13 = vector.shape_cast %12 : vector<1x8x32xf32> to vector<8x32xf32>
    %cst_14 = arith.constant dense<0.000000e+00> : vector<8x32xf32>
    %14 = tpu.matmul %10, %9, %cst_14 {dimension_numbers = #tpu.dot_dimension_numbers<[1], [0], [0], [1], [0, 0, 1, 1], [], []>} : vector<8x32xf32>, vector<32x32xf32>, vector<8x32xf32> -> vector<8x32xf32>
    %15 = arith.addf %13, %14 : vector<8x32xf32>
    %16 = math.tanh %15 : vector<8x32xf32>
    %c1_i32 = arith.constant 1 : i32
    %17 = arith.index_cast %c1_i32 : i32 to index
    %c0_15 = arith.constant 0 : index
    %c0_16 = arith.constant 0 : index
    %18 = vector.load %arg7[%17, %c0_15, %c0_16] : memref<8x8x32xf32, #tpu.memory_space<vmem>>, vector<1x8x32xf32>
    %19 = vector.shape_cast %18 : vector<1x8x32xf32> to vector<8x32xf32>
    %cst_17 = arith.constant dense<0.000000e+00> : vector<8x32xf32>
    %20 = tpu.matmul %16, %9, %cst_17 {dimension_numbers = #tpu.dot_dimension_numbers<[1], [0], [0], [1], [0, 0, 1, 1], [], []>} : vector<8x32xf32>, vector<32x32xf32>, vector<8x32xf32> -> vector<8x32xf32>
    %21 = arith.addf %19, %20 : vector<8x32xf32>
    %22 = math.tanh %21 : vector<8x32xf32>
    %c2_i32 = arith.constant 2 : i32
    %23 = arith.index_cast %c2_i32 : i32 to index
    %c0_18 = arith.constant 0 : index
    %c0_19 = arith.constant 0 : index
    %24 = vector.load %arg7[%23, %c0_18, %c0_19] : memref<8x8x32xf32, #tpu.memory_space<vmem>>, vector<1x8x32xf32>
    %25 = vector.shape_cast %24 : vector<1x8x32xf32> to vector<8x32xf32>
    %cst_20 = arith.constant dense<0.000000e+00> : vector<8x32xf32>
    %26 = tpu.matmul %22, %9, %cst_20 {dimension_numbers = #tpu.dot_dimension_numbers<[1], [0], [0], [1], [0, 0, 1, 1], [], []>} : vector<8x32xf32>, vector<32x32xf32>, vector<8x32xf32> -> vector<8x32xf32>
    %27 = arith.addf %25, %26 : vector<8x32xf32>
    %28 = math.tanh %27 : vector<8x32xf32>
    %c3_i32 = arith.constant 3 : i32
    %29 = arith.index_cast %c3_i32 : i32 to index
    %c0_21 = arith.constant 0 : index
    %c0_22 = arith.constant 0 : index
    %30 = vector.load %arg7[%29, %c0_21, %c0_22] : memref<8x8x32xf32, #tpu.memory_space<vmem>>, vector<1x8x32xf32>
    %31 = vector.shape_cast %30 : vector<1x8x32xf32> to vector<8x32xf32>
    %cst_23 = arith.constant dense<0.000000e+00> : vector<8x32xf32>
    %32 = tpu.matmul %28, %9, %cst_23 {dimension_numbers = #tpu.dot_dimension_numbers<[1], [0], [0], [1], [0, 0, 1, 1], [], []>} : vector<8x32xf32>, vector<32x32xf32>, vector<8x32xf32> -> vector<8x32xf32>
    %33 = arith.addf %31, %32 : vector<8x32xf32>
    %34 = math.tanh %33 : vector<8x32xf32>
    %c4_i32 = arith.constant 4 : i32
    %35 = arith.index_cast %c4_i32 : i32 to index
    %c0_24 = arith.constant 0 : index
    %c0_25 = arith.constant 0 : index
    %36 = vector.load %arg7[%35, %c0_24, %c0_25] : memref<8x8x32xf32, #tpu.memory_space<vmem>>, vector<1x8x32xf32>
    %37 = vector.shape_cast %36 : vector<1x8x32xf32> to vector<8x32xf32>
    %cst_26 = arith.constant dense<0.000000e+00> : vector<8x32xf32>
    %38 = tpu.matmul %34, %9, %cst_26 {dimension_numbers = #tpu.dot_dimension_numbers<[1], [0], [0], [1], [0, 0, 1, 1], [], []>} : vector<8x32xf32>, vector<32x32xf32>, vector<8x32xf32> -> vector<8x32xf32>
    %39 = arith.addf %37, %38 : vector<8x32xf32>
    %40 = math.tanh %39 : vector<8x32xf32>
    %c5_i32 = arith.constant 5 : i32
    %41 = arith.index_cast %c5_i32 : i32 to index
    %c0_27 = arith.constant 0 : index
    %c0_28 = arith.constant 0 : index
    %42 = vector.load %arg7[%41, %c0_27, %c0_28] : memref<8x8x32xf32, #tpu.memory_space<vmem>>, vector<1x8x32xf32>
    %43 = vector.shape_cast %42 : vector<1x8x32xf32> to vector<8x32xf32>
    %cst_29 = arith.constant dense<0.000000e+00> : vector<8x32xf32>
    %44 = tpu.matmul %40, %9, %cst_29 {dimension_numbers = #tpu.dot_dimension_numbers<[1], [0], [0], [1], [0, 0, 1, 1], [], []>} : vector<8x32xf32>, vector<32x32xf32>, vector<8x32xf32> -> vector<8x32xf32>
    %45 = arith.addf %43, %44 : vector<8x32xf32>
    %46 = math.tanh %45 : vector<8x32xf32>
    %c6_i32 = arith.constant 6 : i32
    %47 = arith.index_cast %c6_i32 : i32 to index
    %c0_30 = arith.constant 0 : index
    %c0_31 = arith.constant 0 : index
    %48 = vector.load %arg7[%47, %c0_30, %c0_31] : memref<8x8x32xf32, #tpu.memory_space<vmem>>, vector<1x8x32xf32>
    %49 = vector.shape_cast %48 : vector<1x8x32xf32> to vector<8x32xf32>
    %cst_32 = arith.constant dense<0.000000e+00> : vector<8x32xf32>
    %50 = tpu.matmul %46, %9, %cst_32 {dimension_numbers = #tpu.dot_dimension_numbers<[1], [0], [0], [1], [0, 0, 1, 1], [], []>} : vector<8x32xf32>, vector<32x32xf32>, vector<8x32xf32> -> vector<8x32xf32>
    %51 = arith.addf %49, %50 : vector<8x32xf32>
    %52 = math.tanh %51 : vector<8x32xf32>
    %c7_i32 = arith.constant 7 : i32
    %53 = arith.index_cast %c7_i32 : i32 to index
    %c0_33 = arith.constant 0 : index
    %c0_34 = arith.constant 0 : index
    %54 = vector.load %arg7[%53, %c0_33, %c0_34] : memref<8x8x32xf32, #tpu.memory_space<vmem>>, vector<1x8x32xf32>
    %55 = vector.shape_cast %54 : vector<1x8x32xf32> to vector<8x32xf32>
    %cst_35 = arith.constant dense<0.000000e+00> : vector<8x32xf32>
    %56 = tpu.matmul %52, %9, %cst_35 {dimension_numbers = #tpu.dot_dimension_numbers<[1], [0], [0], [1], [0, 0, 1, 1], [], []>} : vector<8x32xf32>, vector<32x32xf32>, vector<8x32xf32> -> vector<8x32xf32>
    %57 = arith.addf %55, %56 : vector<8x32xf32>
    %58 = math.tanh %57 : vector<8x32xf32>
    %c8_i32 = arith.constant 8 : i32
    %c0_36 = arith.constant 0 : index
    %c0_37 = arith.constant 0 : index
    %59 = vector.load %arg3[%c0_36, %c0_37] : memref<32x16xf32, #tpu.memory_space<vmem>>, vector<32x16xf32>
    %cst_38 = arith.constant dense<0.000000e+00> : vector<8x16xf32>
    %60 = tpu.matmul %58, %59, %cst_38 {dimension_numbers = #tpu.dot_dimension_numbers<[1], [0], [0], [1], [0, 0, 1, 1], [], []>} : vector<8x32xf32>, vector<32x16xf32>, vector<8x16xf32> -> vector<8x16xf32>
    %c0_39 = arith.constant 0 : index
    %c0_40 = arith.constant 0 : index
    %61 = vector.load %arg5[%c0_39, %c0_40] : memref<1x16xf32, #tpu.memory_space<vmem>>, vector<1x16xf32>
    %62 = vector.broadcast %61 : vector<1x16xf32> to vector<8x16xf32>
    %63 = arith.addf %60, %62 : vector<8x16xf32>
    %c0_41 = arith.constant 0 : index
    %c0_42 = arith.constant 0 : index
    %64 = vector.load %arg6[%c0_41, %c0_42] : memref<8x16xf32, #tpu.memory_space<vmem>>, vector<8x16xf32>
    tpu.vector_store %arg6[%c0_41, %c0_42], %63 {strides = array<i32>} : memref<8x16xf32, #tpu.memory_space<vmem>>, vector<8x16xf32>,
    return
  }
}

</mosaic_0001>

<llo_original>
// kernel: tpu_custom_call.1
$region0: #{tpu_custom_call.1}
  #allocation0 [shape = 'u32[]', space=smem, size = 0x4, offset = 0x4, fixed_abs, tag = 'smem constant byte address 0x4 - core index']
  #allocation1 [shape = 'u32[72,128]{1,0:T(1,128)}', space=vmem, size = 0x9000, scoped, tag = 'internal scratch']
  #allocation2 [shape = 'f32[8,8,32]{2,1,0:T(8,128)}', space=vmem, size = 0x8000, scoped, tag = 'scratch operand']
  %s0 = inlined_call_operand.hbm [shape: f32[8,8,16], index: 0, kind: input, shape index: {}]
  %s1 = inlined_call_operand.vmem [shape: f32[16,32], index: 1, kind: input, shape index: {}]
  %s2 = inlined_call_operand.vmem [shape: f32[32,32], index: 2, kind: input, shape index: {}]
  %s3 = inlined_call_operand.vmem [shape: f32[32,16], index: 3, kind: input, shape index: {}]
  %s4 = inlined_call_operand.vmem [shape: f32[1,32], index: 4, kind: input, shape index: {}]
  %s5 = inlined_call_operand.vmem [shape: f32[1,16], index: 5, kind: input, shape index: {}]
  %s6 = inlined_call_operand.hbm [shape: f32[8,16], index: 6, kind: output, shape index: {}]
  %s7 = sld [smem:[#allocation0]]
  $region38: #{tpu_custom_call.1} parent=0
    _
  %s9 = ssub.s32 1, %s7
  %s10 = scalar_select 0, %s9, %s7
  $region1: #{tpu_custom_call.1} parent=0
    #allocation3 [shape = 'u8[32768]{0}', space=vmem, size = 0x8000, scoped, tag = 'input window, operand 0, single buffered']
    #allocation4 [shape = 's32[1]{0}', space=sflag, size = 0x4, scoped, tag = 'scoped memory for tpu_custom_call.1']
    #allocation5 [shape = 's32[1]{0}', space=sflag, size = 0x4, scoped, tag = 'scoped memory for tpu_custom_call.1']
    #allocation6 [shape = 'u8[4096]{0}', space=vmem, size = 0x1000, scoped, tag = 'output window, operand 0, single buffered']
    %11 = vsyncpa [#allocation4], 0
    %12 = vsyncpa [#allocation5], 0
    // Predicated region
    $region2: #{tpu_custom_call.1} parent=1 // pred_check
      _
    $region3: #{tpu_custom_call.1} parent=1 // pred_check_branch
      %14 = sbr.rel (0) target = $region5
    $region4: #{tpu_custom_call.1} parent=1 // pred_region
      %16 = vsyncadd [#allocation4], 0
      %s17 = sshll.u32 %s0, 4
      %s18 = int_to_ptr.hbm [resolvable:$true] %s17
      %s19 = sshll.u32 [#allocation3], 4
      %s20 = int_to_ptr.vmem [resolvable:$true] %s19
      %25 = dma.hbm_to_vmem [thread:$0]  %s18, 1024, %s20, [#allocation4], 128, 128, 8
    $region5: #{tpu_custom_call.1} parent=1 // pred_fallthru
      _
    // Predicated region
    $region6: #{tpu_custom_call.1} parent=1 // pred_check
      _
    $region7: #{tpu_custom_call.1} parent=1 // pred_check_branch
      %27 = sbr.rel (0) target = $region9
    $region8: #{tpu_custom_call.1} parent=1 // pred_region
      _
    $region9: #{tpu_custom_call.1} parent=1 // pred_fallthru
      _
    // Predicated region
    $region10: #{tpu_custom_call.1} parent=1 // pred_check
      _
    $region11: #{tpu_custom_call.1} parent=1 // pred_check_branch
      %29 = sbr.rel (0) target = $region13
    $region12: #{tpu_custom_call.1} parent=1 // pred_region
      _
    $region13: #{tpu_custom_call.1} parent=1 // pred_fallthru
      _
    // Predicated region
    $region14: #{tpu_custom_call.1} parent=1 // pred_check
      _
    $region15: #{tpu_custom_call.1} parent=1 // pred_check_branch
      %31 = sbr.rel (0) target = $region17
    $region16: #{tpu_custom_call.1} parent=1 // pred_region
      _
    $region17: #{tpu_custom_call.1} parent=1 // pred_fallthru
      _
    // Predicated region
    $region18: #{tpu_custom_call.1} parent=1 // pred_check
      _
    $region19: #{tpu_custom_call.1} parent=1 // pred_check_branch
      %33 = sbr.rel (0) target = $region21
    $region20: #{tpu_custom_call.1} parent=1 // pred_region
      _
    $region21: #{tpu_custom_call.1} parent=1 // pred_fallthru
      _
    // Predicated region
    $region22: #{tpu_custom_call.1} parent=1 // pred_check
      _
    $region23: #{tpu_custom_call.1} parent=1 // pred_check_branch
      %35 = sbr.rel (0) target = $region25
    $region24: #{tpu_custom_call.1} parent=1 // pred_region
      _
    $region25: #{tpu_custom_call.1} parent=1 // pred_fallthru
      _
    // Predicated region
    $region26: #{tpu_custom_call.1} parent=1 // pred_check
      _
    $region27: #{tpu_custom_call.1} parent=1 // pred_check_branch
      %37 = sbr.rel (0) target = $region29
    $region28: #{tpu_custom_call.1} parent=1 // pred_region
      %39 = dma.done [#allocation4], 1024
    $region29: #{tpu_custom_call.1} parent=1 // pred_fallthru
      _
    %v40 = vld [vmem:[#allocation3] sm:$0xff]
    %v41 = vld [vmem:[#allocation3 + $0x8] sm:$0xff]
    %v42 = vld [vmem:[#allocation3 + $0x10] sm:$0xff]
    %v43 = vld [vmem:[#allocation3 + $0x18] sm:$0xff]
    %v44 = vld [vmem:[#allocation3 + $0x20] sm:$0xff]
    %v45 = vld [vmem:[#allocation3 + $0x28] sm:$0xff]
    %v46 = vld [vmem:[#allocation3 + $0x30] sm:$0xff]
    %v47 = vld [vmem:[#allocation3 + $0x38] sm:$0xff]
    %v48 = vld [vmem:[%s1] sm:$0xff]
    %v49 = vld [vmem:[%s1 + $0x8] sm:$0xff]
    %v50 = vld [vmem:[%s4] sm:$0x1]
    %v52 = vperm.slane %v50, 0
    %vm54 = vcmask 130048
    %v56 = vsel %vm54, %v40, 0
    %v59 = vsel %vm54, %v41, 0
    %v62 = vsel %vm54, %v42, 0
    %v65 = vsel %vm54, %v43, 0
    %v68 = vsel %vm54, %v44, 0
    %v71 = vsel %vm54, %v45, 0
    %v74 = vsel %vm54, %v46, 0
    %v77 = vsel %vm54, %v47, 0
    %79 = vmatpush.msra.mxu0 0.0
    %80 = vmatpush.msra.mxu0 0.0
    %81 = vmatpush.msra.mxu0 0.0
    %82 = vmatpush.msra.mxu0 0.0
    %83 = vmatpush.msra.mxu0 0.0
    %84 = vmatpush.msra.mxu0 0.0
    %85 = vmatpush.msra.mxu0 0.0
    %86 = vmatpush.msra.mxu0 0.0
    %87 = vmatpush.msra.mxu0 0.0
    %88 = vmatpush.msra.mxu0 0.0
    %89 = vmatpush.msra.mxu0 0.0
    %90 = vmatpush.msra.mxu0 0.0
    %91 = vmatpush.msra.mxu0 0.0
    %92 = vmatpush.msra.mxu0 0.0
    %93 = vmatpush.msra.mxu0 %v49
    %94 = vmatpush.msra.mxu0 %v48
    %95 = vmatmul.f32.gmra.mxu0 %v56
    %v96 = vpop.f32.mrf.mxu0
    %v97 = vadd.f32 %v52, %v96
    %98 = vmatmul.f32.gmra.mxu0 %v59
    %v99 = vpop.f32.mrf.mxu0
    %v100 = vadd.f32 %v52, %v99
    %101 = vmatmul.f32.gmra.mxu0 %v62
    %v102 = vpop.f32.mrf.mxu0
    %v103 = vadd.f32 %v52, %v102
    %104 = vmatmul.f32.gmra.mxu0 %v65
    %v105 = vpop.f32.mrf.mxu0
    %v106 = vadd.f32 %v52, %v105
    %107 = vmatmul.f32.gmra.mxu0 %v68
    %v108 = vpop.f32.mrf.mxu0
    %v109 = vadd.f32 %v52, %v108
    %110 = vmatmul.f32.gmra.mxu0 %v71
    %v111 = vpop.f32.mrf.mxu0
    %v112 = vadd.f32 %v52, %v111
    %113 = vmatmul.f32.gmra.mxu0 %v74
    %v114 = vpop.f32.mrf.mxu0
    %v115 = vadd.f32 %v52, %v114
    %116 = vmatmul.f32.gmra.mxu0 %v77
    %v117 = vpop.f32.mrf.mxu0
    %v118 = vadd.f32 %v52, %v117
    %119 = vdwg.mxu0
    %vm120 = vcmask 261120
    %121 = vst.msk [vmem:[#allocation2] sm:$0xff] %vm120, %v97
    %122 = vst.msk [vmem:[#allocation2 + $0x8] sm:$0xff] %vm120, %v100
    %123 = vst.msk [vmem:[#allocation2 + $0x10] sm:$0xff] %vm120, %v103
    %124 = vst.msk [vmem:[#allocation2 + $0x18] sm:$0xff] %vm120, %v106
    %125 = vst.msk [vmem:[#allocation2 + $0x20] sm:$0xff] %vm120, %v109
    %126 = vst.msk [vmem:[#allocation2 + $0x28] sm:$0xff] %vm120, %v112
    %127 = vst.msk [vmem:[#allocation2 + $0x30] sm:$0xff] %vm120, %v115
    %128 = vst.msk [vmem:[#allocation2 + $0x38] sm:$0xff] %vm120, %v118
    %v129 = vld [vmem:[%s2] sm:$0xff]
    %v130 = vld [vmem:[%s2 + $0x8] sm:$0xff]
    %v131 = vld [vmem:[%s2 + $0x10] sm:$0xff]
    %v132 = vld [vmem:[%s2 + $0x18] sm:$0xff]
    %v133 = vld [vmem:[#allocation2] sm:$0xff]
    %v135 = vsel %vm120, 0.0, 0
    %137 = vmatpush.msra.mxu0 0.0
    %138 = vmatpush.msra.mxu0 0.0
    %139 = vmatpush.msra.mxu0 0.0
    %140 = vmatpush.msra.mxu0 0.0
    %141 = vmatpush.msra.mxu0 0.0
    %142 = vmatpush.msra.mxu0 0.0
    %143 = vmatpush.msra.mxu0 0.0
    %144 = vmatpush.msra.mxu0 0.0
    %145 = vmatpush.msra.mxu0 0.0
    %146 = vmatpush.msra.mxu0 0.0
    %147 = vmatpush.msra.mxu0 0.0
    %148 = vmatpush.msra.mxu0 0.0
    %149 = vmatpush.msra.mxu0 %v132
    %150 = vmatpush.msra.mxu0 %v131
    %151 = vmatpush.msra.mxu0 %v130
    %152 = vmatpush.msra.mxu0 %v129
    %153 = vmatmul.f32.gmra.mxu0 %v135
    %v154 = vpop.f32.mrf.mxu0
    %v155 = vadd.f32 0.0, %v154
    %156 = vdwg.mxu0
    %v157 = vadd.f32 %v133, %v155
    %v158 = vtanh.pop %v157
    %s159 = scalar_lea.vmem [#allocation2], 8
    %v160 = vld [vmem:[%s159] sm:$0xff]
    %v162 = vsel %vm120, %v158, 0
    %164 = vmatpush.msra.mxu0 0.0
    %165 = vmatpush.msra.mxu0 0.0
    %166 = vmatpush.msra.mxu0 0.0
    %167 = vmatpush.msra.mxu0 0.0
    %168 = vmatpush.msra.mxu0 0.0
    %169 = vmatpush.msra.mxu0 0.0
    %170 = vmatpush.msra.mxu0 0.0
    %171 = vmatpush.msra.mxu0 0.0
    %172 = vmatpush.msra.mxu0 0.0
    %173 = vmatpush.msra.mxu0 0.0
    %174 = vmatpush.msra.mxu0 0.0
    %175 = vmatpush.msra.mxu0 0.0
    %176 = vmatpush.msra.mxu0 %v132
    %177 = vmatpush.msra.mxu0 %v131
    %178 = vmatpush.msra.mxu0 %v130
    %179 = vmatpush.msra.mxu0 %v129
    %180 = vmatmul.f32.gmra.mxu0 %v162
    %v181 = vpop.f32.mrf.mxu0
    %v182 = vadd.f32 0.0, %v181
    %183 = vdwg.mxu0
    %v184 = vadd.f32 %v160, %v182
    %v185 = vtanh.pop %v184
    %s186 = scalar_lea.vmem [#allocation2], 16
    %v187 = vld [vmem:[%s186] sm:$0xff]
    %v189 = vsel %vm120, %v185, 0
    %191 = vmatpush.msra.mxu0 0.0
    %192 = vmatpush.msra.mxu0 0.0
    %193 = vmatpush.msra.mxu0 0.0
    %194 = vmatpush.msra.mxu0 0.0
    %195 = vmatpush.msra.mxu0 0.0
    %196 = vmatpush.msra.mxu0 0.0
    %197 = vmatpush.msra.mxu0 0.0
    %198 = vmatpush.msra.mxu0 0.0
    %199 = vmatpush.msra.mxu0 0.0
    %200 = vmatpush.msra.mxu0 0.0
    %201 = vmatpush.msra.mxu0 0.0
    %202 = vmatpush.msra.mxu0 0.0
    %203 = vmatpush.msra.mxu0 %v132
    %204 = vmatpush.msra.mxu0 %v131
    %205 = vmatpush.msra.mxu0 %v130
    %206 = vmatpush.msra.mxu0 %v129
    %207 = vmatmul.f32.gmra.mxu0 %v189
    %v208 = vpop.f32.mrf.mxu0
    %v209 = vadd.f32 0.0, %v208
    %210 = vdwg.mxu0
    %v211 = vadd.f32 %v187, %v209
    %v212 = vtanh.pop %v211
    %s213 = scalar_lea.vmem [#allocation2], 24
    %v214 = vld [vmem:[%s213] sm:$0xff]
    %v216 = vsel %vm120, %v212, 0
    %218 = vmatpush.msra.mxu0 0.0
    %219 = vmatpush.msra.mxu0 0.0
    %220 = vmatpush.msra.mxu0 0.0
    %221 = vmatpush.msra.mxu0 0.0
    %222 = vmatpush.msra.mxu0 0.0
    %223 = vmatpush.msra.mxu0 0.0
    %224 = vmatpush.msra.mxu0 0.0
    %225 = vmatpush.msra.mxu0 0.0
    %226 = vmatpush.msra.mxu0 0.0
    %227 = vmatpush.msra.mxu0 0.0
    %228 = vmatpush.msra.mxu0 0.0
    %229 = vmatpush.msra.mxu0 0.0
    %230 = vmatpush.msra.mxu0 %v132
    %231 = vmatpush.msra.mxu0 %v131
    %232 = vmatpush.msra.mxu0 %v130
    %233 = vmatpush.msra.mxu0 %v129
    %234 = vmatmul.f32.gmra.mxu0 %v216
    %v235 = vpop.f32.mrf.mxu0
    %v236 = vadd.f32 0.0, %v235
    %237 = vdwg.mxu0
    %v238 = vadd.f32 %v214, %v236
    %v239 = vtanh.pop %v238
    %s240 = scalar_lea.vmem [#allocation2], 32
    %v241 = vld [vmem:[%s240] sm:$0xff]
    %v243 = vsel %vm120, %v239, 0
    %245 = vmatpush.msra.mxu0 0.0
    %246 = vmatpush.msra.mxu0 0.0
    %247 = vmatpush.msra.mxu0 0.0
    %248 = vmatpush.msra.mxu0 0.0
    %249 = vmatpush.msra.mxu0 0.0
    %250 = vmatpush.msra.mxu0 0.0
    %251 = vmatpush.msra.mxu0 0.0
    %252 = vmatpush.msra.mxu0 0.0
    %253 = vmatpush.msra.mxu0 0.0
    %254 = vmatpush.msra.mxu0 0.0
    %255 = vmatpush.msra.mxu0 0.0
    %256 = vmatpush.msra.mxu0 0.0
    %257 = vmatpush.msra.mxu0 %v132
    %258 = vmatpush.msra.mxu0 %v131
    %259 = vmatpush.msra.mxu0 %v130
    %260 = vmatpush.msra.mxu0 %v129
    %261 = vmatmul.f32.gmra.mxu0 %v243
    %v262 = vpop.f32.mrf.mxu0
    %v263 = vadd.f32 0.0, %v262
    %264 = vdwg.mxu0
    %v265 = vadd.f32 %v241, %v263
    %v266 = vtanh.pop %v265
    %s267 = scalar_lea.vmem [#allocation2], 40
    %v268 = vld [vmem:[%s267] sm:$0xff]
    %v270 = vsel %vm120, %v266, 0
    %272 = vmatpush.msra.mxu0 0.0
    %273 = vmatpush.msra.mxu0 0.0
    %274 = vmatpush.msra.mxu0 0.0
    %275 = vmatpush.msra.mxu0 0.0
    %276 = vmatpush.msra.mxu0 0.0
    %277 = vmatpush.msra.mxu0 0.0
    %278 = vmatpush.msra.mxu0 0.0
    %279 = vmatpush.msra.mxu0 0.0
    %280 = vmatpush.msra.mxu0 0.0
    %281 = vmatpush.msra.mxu0 0.0
    %282 = vmatpush.msra.mxu0 0.0
    %283 = vmatpush.msra.mxu0 0.0
    %284 = vmatpush.msra.mxu0 %v132
    %285 = vmatpush.msra.mxu0 %v131
    %286 = vmatpush.msra.mxu0 %v130
    %287 = vmatpush.msra.mxu0 %v129
    %288 = vmatmul.f32.gmra.mxu0 %v270
    %v289 = vpop.f32.mrf.mxu0
    %v290 = vadd.f32 0.0, %v289
    %291 = vdwg.mxu0
    %v292 = vadd.f32 %v268, %v290
    %v293 = vtanh.pop %v292
    %s294 = scalar_lea.vmem [#allocation2], 48
    %v295 = vld [vmem:[%s294] sm:$0xff]
    %v297 = vsel %vm120, %v293, 0
    %299 = vmatpush.msra.mxu0 0.0
    %300 = vmatpush.msra.mxu0 0.0
    %301 = vmatpush.msra.mxu0 0.0
    %302 = vmatpush.msra.mxu0 0.0
    %303 = vmatpush.msra.mxu0 0.0
    %304 = vmatpush.msra.mxu0 0.0
    %305 = vmatpush.msra.mxu0 0.0
    %306 = vmatpush.msra.mxu0 0.0
    %307 = vmatpush.msra.mxu0 0.0
    %308 = vmatpush.msra.mxu0 0.0
    %309 = vmatpush.msra.mxu0 0.0
    %310 = vmatpush.msra.mxu0 0.0
    %311 = vmatpush.msra.mxu0 %v132
    %312 = vmatpush.msra.mxu0 %v131
    %313 = vmatpush.msra.mxu0 %v130
    %314 = vmatpush.msra.mxu0 %v129
    %315 = vmatmul.f32.gmra.mxu0 %v297
    %v316 = vpop.f32.mrf.mxu0
    %v317 = vadd.f32 0.0, %v316
    %318 = vdwg.mxu0
    %v319 = vadd.f32 %v295, %v317
    %v320 = vtanh.pop %v319
    %s321 = scalar_lea.vmem [#allocation2], 56
    %v322 = vld [vmem:[%s321] sm:$0xff]
    %v324 = vsel %vm120, %v320, 0
    %326 = vmatpush.msra.mxu0 0.0
    %327 = vmatpush.msra.mxu0 0.0
    %328 = vmatpush.msra.mxu0 0.0
    %329 = vmatpush.msra.mxu0 0.0
    %330 = vmatpush.msra.mxu0 0.0
    %331 = vmatpush.msra.mxu0 0.0
    %332 = vmatpush.msra.mxu0 0.0
    %333 = vmatpush.msra.mxu0 0.0
    %334 = vmatpush.msra.mxu0 0.0
    %335 = vmatpush.msra.mxu0 0.0
    %336 = vmatpush.msra.mxu0 0.0
    %337 = vmatpush.msra.mxu0 0.0
    %338 = vmatpush.msra.mxu0 %v132
    %339 = vmatpush.msra.mxu0 %v131
    %340 = vmatpush.msra.mxu0 %v130
    %341 = vmatpush.msra.mxu0 %v129
    %342 = vmatmul.f32.gmra.mxu0 %v324
    %v343 = vpop.f32.mrf.mxu0
    %v344 = vadd.f32 0.0, %v343
    %345 = vdwg.mxu0
    %v346 = vadd.f32 %v322, %v344
    %v347 = vtanh.pop %v346
    %v348 = vld [vmem:[%s3] sm:$0xff]
    %v349 = vld [vmem:[%s3 + $0x8] sm:$0xff]
    %v350 = vld [vmem:[%s3 + $0x10] sm:$0xff]
    %v351 = vld [vmem:[%s3 + $0x18] sm:$0xff]
    %v352 = vld [vmem:[%s5] sm:$0x1]
    %v354 = vperm.slane %v352, 0
    %v357 = vsel %vm120, %v347, 0
    %359 = vmatpush.msra.mxu0 0.0
    %360 = vmatpush.msra.mxu0 0.0
    %361 = vmatpush.msra.mxu0 0.0
    %362 = vmatpush.msra.mxu0 0.0
    %363 = vmatpush.msra.mxu0 0.0
    %364 = vmatpush.msra.mxu0 0.0
    %365 = vmatpush.msra.mxu0 0.0
    %366 = vmatpush.msra.mxu0 0.0
    %367 = vmatpush.msra.mxu0 0.0
    %368 = vmatpush.msra.mxu0 0.0
    %369 = vmatpush.msra.mxu0 0.0
    %370 = vmatpush.msra.mxu0 0.0
    %371 = vmatpush.msra.mxu0 %v351
    %372 = vmatpush.msra.mxu0 %v350
    %373 = vmatpush.msra.mxu0 %v349
    %374 = vmatpush.msra.mxu0 %v348
    %375 = vmatmul.f32.gmra.mxu0 %v357
    %v376 = vpop.f32.mrf.mxu0
    %v377 = vadd.f32 %v354, %v376
    %378 = vdwg.mxu0
    %379 = vst.msk [vmem:[#allocation6] sm:$0xff] %vm54, %v377
    // Predicated region
    $region30: #{tpu_custom_call.1} parent=1 // pred_check
      _
    $region31: #{tpu_custom_call.1} parent=1 // pred_check_branch
      %381 = sbr.rel (0) target = $region33
    $region32: #{tpu_custom_call.1} parent=1 // pred_region
      %383 = vsyncadd [#allocation5], 0
      %s385 = sshll.u32 [#allocation6], 4
      %s386 = int_to_ptr.vmem [resolvable:$true] %s385
      %s387 = sshll.u32 %s6, 4
      %s388 = int_to_ptr.hbm [resolvable:$true] %s387
      %390 = dma.vmem_to_hbm [thread:$0]  %s386, 128, %s388, [#allocation5]
    $region33: #{tpu_custom_call.1} parent=1 // pred_fallthru
      _
    // Predicated region
    $region34: #{tpu_custom_call.1} parent=1 // pred_check
      _
    $region35: #{tpu_custom_call.1} parent=1 // pred_check_branch
      %392 = sbr.rel (0) target = $region37
    $region36: #{tpu_custom_call.1} parent=1 // pred_region
      %394 = dma.done [#allocation5], 128
    $region37: #{tpu_custom_call.1} parent=1 // pred_fallthru
      _
    %395 = vsyncpa [#allocation4], 1
    %396 = vsyncpa [#allocation5], 1

</llo_original>
